<compile_context>
chip_gen: v7x
topology: tpu7x:2x2x1
jax: 0.10.0
libtpu: 0.0.40
codegen_flags: <defaults>
</compile_context>

<pallas_src>
import jax
import jax.numpy as jnp
from jax.experimental import pallas as pl
from jax.experimental.pallas import tpu as pltpu


def _round_up(x, m):
    return ((x + m - 1) // m) * m


def _mlp_kernel(lbl_ref, z_ref, w1_ref, b1_ref, w2_ref, b2_ref, w3_ref, b3_ref,
                o_ref):
    """Fused one-hot label gather + Linear/ReLU/Linear/ReLU/Linear/Tanh."""
    cdt = w1_ref.dtype                    # MXU input dtype (bf16 default, f32 opt.)
    bm = z_ref.shape[0]
    kz = z_ref.shape[1]                   # z lanes (padded to 128)
    lp = w1_ref.shape[0] - kz             # one-hot / folded-embedding lanes

    # Labels arrive lane-dense as a (1, bm) row; a tiny transpose on the
    # otherwise idle XLU gives the (bm, 1) column for the one-hot compare.
    lbl_col = jnp.transpose(lbl_ref[...])                        # (bm, 1) int32
    lane = jax.lax.broadcasted_iota(jnp.int32, (bm, lp), 1)      # (bm, lp)
    onehot = (lane == lbl_col).astype(cdt)

    # Merged first layer: x1 = [z_pad | onehot].  Both segments are 128-lane
    # multiples so the concat is pure vreg placement (no relayout / extra VMEM
    # copy), and the single K = kz + lp (= 256) matmul fills the MXU.
    x1 = jnp.concatenate([z_ref[...].astype(cdt), onehot], axis=-1)
    h1 = jnp.dot(x1, w1_ref[...], preferred_element_type=jnp.float32)
    h1 = jnp.maximum(h1 + b1_ref[...], 0.0)                      # f32 epilogue

    h2 = jnp.dot(h1.astype(cdt), w2_ref[...], preferred_element_type=jnp.float32)
    h2 = jnp.maximum(h2 + b2_ref[...], 0.0)

    h3 = jnp.dot(h2.astype(cdt), w3_ref[...], preferred_element_type=jnp.float32)
    o_ref[...] = jnp.tanh(h3 + b3_ref[...]).astype(o_ref.dtype)


def init_params(key, latent_dim, label_dim, hidden_dim, output_dim):
    """Deterministic synthetic parameters matching the torch module's shapes."""
    keys = jax.random.split(key, 7)

    def uniform(k, shape, fan_in):
        bound = 1.0 / jnp.sqrt(fan_in)
        return jax.random.uniform(k, shape, jnp.float32, -bound, bound)

    in_dim = latent_dim + label_dim
    return {
        # nn.Embedding(label_dim, label_dim) -> N(0,1) init in torch.
        "label_emb": jax.random.normal(keys[0], (label_dim, label_dim), jnp.float32),
        # nn.Linear stores weight (out,in); we keep the transposed (in,out) layout.
        "w1": uniform(keys[1], (in_dim, hidden_dim), in_dim),
        "b1": uniform(keys[2], (1, hidden_dim), in_dim),
        "w2": uniform(keys[3], (hidden_dim, hidden_dim), hidden_dim),
        "b2": uniform(keys[4], (1, hidden_dim), hidden_dim),
        "w3": uniform(keys[5], (hidden_dim, output_dim), hidden_dim),
        "b3": uniform(keys[6], (1, output_dim), hidden_dim),
    }


def prepare_params(params, latent_dim, compute_dtype=jnp.bfloat16):
    """One-time prep: fold the embedding through layer 1, merge with W1's
    z-columns into a single (Kz + Lp, Hp) matrix, pad features to 128 lanes.

    compute_dtype is the MXU-input dtype.  bf16 is the right default on every
    TPU generation (the v5e MXU is natively bf16; f32 matmuls are multi-pass
    and double weight DMA/VMEM).  The bias/ReLU/tanh epilogue always stays
    f32.  Pass jnp.float32 for a strict-accuracy path.
    """
    emb = params["label_emb"]                  # (L, L)
    w1 = params["w1"]                          # (latent + L, H)
    label_dim = emb.shape[0]
    H = w1.shape[1]
    O = params["w3"].shape[1]
    Kz = _round_up(latent_dim, 128)            # z lanes inside the merged LHS
    Lp = _round_up(label_dim, 128)
    Hp = _round_up(H, 128)
    Op = _round_up(O, 128)

    def pad2(a, rows, cols):
        return jnp.pad(a, ((0, rows - a.shape[0]), (0, cols - a.shape[1])))

    w1_z = w1[:latent_dim, :]                  # (latent, H)
    w1_l = w1[latent_dim:, :]                  # (L, H)
    # Fold the embedding through the first linear layer (once, off hot path).
    emb_proj = jnp.dot(emb, w1_l, precision=jax.lax.Precision.HIGHEST)  # (L, H)

    # Merged layer-1 weight: rows [0, Kz) multiply the zero-padded z lanes,
    # rows [Kz, Kz+Lp) multiply the in-kernel one-hot (folded embedding rows).
    # Zero-padded rows/cols propagate exact zeros everywhere.
    w1_full = jnp.concatenate([pad2(w1_z, Kz, Hp), pad2(emb_proj, Lp, Hp)], axis=0)

    return {
        "w1": w1_full.astype(compute_dtype),                   # (Kz + Lp, Hp)
        "b1": pad2(params["b1"], 1, Hp),                       # biases stay f32
        "w2": pad2(params["w2"], Hp, Hp).astype(compute_dtype),
        "b2": pad2(params["b2"], 1, Hp),
        "w3": pad2(params["w3"], Hp, Op).astype(compute_dtype),
        "b3": pad2(params["b3"], 1, Op),
        "latent_dim": int(latent_dim),
        "z_pad_dim": int(Kz),
        "output_dim": int(O),
    }


def generator_forward(z, labels, prep, out_dtype=jnp.float32):
    """Forward pass equivalent to GeneratorNet.forward(z, labels).

    out_dtype: output dtype; jnp.bfloat16 halves the dominant output HBM
    stream at large batch (worth ~1.4-1.8x on the memory-bound roofline).
    """
    B, latent = z.shape
    assert latent == prep["latent_dim"]
    cdt = prep["w1"].dtype
    Kz = prep["z_pad_dim"]
    Ktot, Hp = prep["w1"].shape
    Op = prep["w3"].shape[1]
    O = prep["output_dim"]

    # Batch tiling (all static / trace-time):
    #  * B <= 256: a single grid step (latency-bound regime, no step overhead).
    #  * B  > 256: tiles up to 1024 rows for the HBM roofline, but never fewer
    #    than 2 grid steps so v7x's second TensorCore gets work.
    align = 16 if (jnp.dtype(cdt).itemsize < 4 or jnp.dtype(out_dtype).itemsize < 4) else 8
    if B <= 256:
        bm = _round_up(B, align)
    else:
        bm = min(1024, _round_up((B + 1) // 2, align))
    Bp = _round_up(B, bm)
    nb = Bp // bm

    # z: pad batch to Bp and lanes to 128 (zero K-lanes contribute nothing);
    # lane-dense blocks avoid masked vreg loads and enable the merged matmul.
    zp = jnp.pad(z, ((0, Bp - B), (0, Kz - latent))).astype(cdt)

    # Labels: lane-dense (nb, 1, bm) int32 rows (one tiny DMA row per grid
    # step) instead of a (Bp, 1) column that the tiled layout inflates ~128x.
    lbl = labels.astype(jnp.int32)
    if Bp != B:
        lbl = jnp.pad(lbl, ((0, Bp - B),))      # pad label 0; rows sliced off below
    lbl3 = lbl.reshape(nb, 1, bm)

    weight_keys = ("w1", "b1", "w2", "b2", "w3", "b3")
    param_bytes = sum(prep[k].size * prep[k].dtype.itemsize for k in weight_keys)
    flops = 2 * Bp * (Ktot * Hp + Hp * Hp + Hp * Op)
    bytes_accessed = (zp.size * zp.dtype.itemsize + lbl3.size * 4
                      + Bp * Op * jnp.dtype(out_dtype).itemsize + param_bytes)

    batch_map = lambda i: (i, 0)
    const_map = lambda i: (0, 0)

    out = pl.pallas_call(
        _mlp_kernel,
        out_shape=jax.ShapeDtypeStruct((Bp, Op), out_dtype),
        grid=(nb,),
        in_specs=[
            pl.BlockSpec((None, 1, bm), lambda i: (i, 0, 0)),   # labels (lane-dense)
            pl.BlockSpec((bm, Kz), batch_map),                  # z (128-lane padded)
            pl.BlockSpec((Ktot, Hp), const_map),                # merged W1 (resident)
            pl.BlockSpec((1, Hp), const_map),                   # b1
            pl.BlockSpec((Hp, Hp), const_map),                  # w2
            pl.BlockSpec((1, Hp), const_map),                   # b2
            pl.BlockSpec((Hp, Op), const_map),                  # w3
            pl.BlockSpec((1, Op), const_map),                   # b3
        ],
        out_specs=pl.BlockSpec((bm, Op), batch_map),
        compiler_params=pltpu.CompilerParams(
            dimension_semantics=("parallel",),
            # Weights are VMEM-resident (<0.25 MiB here); even bm=1024 f32
            # blocks double-buffered stay under ~4 MiB, so 32 MiB leaves >8x
            # headroom on every generation (incl. v7x's 64 MiB physical VMEM).
            vmem_limit_bytes=32 * 1024 * 1024,
        ),
        cost_estimate=pl.CostEstimate(
            flops=flops,
            transcendentals=Bp * Op,
            bytes_accessed=bytes_accessed,
        ),
    )(lbl3, zp, prep["w1"], prep["b1"], prep["w2"], prep["b2"], prep["w3"], prep["b3"])
    return out[:B, :O]


if __name__ == "__main__":
    latent_dim, label_dim, hidden_dim, output_dim = 16, 10, 32, 64

    key = jax.random.PRNGKey(0)
    k_params, k_z, k_lbl = jax.random.split(key, 3)
    params = init_params(k_params, latent_dim, label_dim, hidden_dim, output_dim)

    def torch_ref(zz, ll):
        # Pure-JAX reference mirroring the torch module exactly.
        c = jnp.take(params["label_emb"], ll, axis=0)
        x = jnp.concatenate([zz, c], axis=1)
        h = jnp.maximum(x @ params["w1"] + params["b1"], 0.0)
        h = jnp.maximum(h @ params["w2"] + params["b2"], 0.0)
        return jnp.tanh(h @ params["w3"] + params["b3"])

    prep_f32 = prepare_params(params, latent_dim, compute_dtype=jnp.float32)
    prep_bf16 = prepare_params(params, latent_dim)                 # bf16 default

    # Small batch: latency-bound path (single grid step, merged K=256 matmul).
    batch = 8
    z = jax.random.normal(k_z, (batch, latent_dim), jnp.float32)
    labels = jax.random.randint(k_lbl, (batch,), 0, label_dim, jnp.int32)
    ref = torch_ref(z, labels)

    out_f32 = jax.block_until_ready(generator_forward(z, labels, prep_f32))
    assert out_f32.shape == (batch, output_dim)
    err = float(jnp.max(jnp.abs(out_f32 - ref)))
    assert err < 1e-4, err

    out_bf16 = jax.block_until_ready(
        generator_forward(z, labels, prep_bf16, out_dtype=jnp.bfloat16))
    assert out_bf16.shape == (batch, output_dim)
    err = float(jnp.max(jnp.abs(out_bf16.astype(jnp.float32) - ref)))
    assert err < 1e-1, err

    # Medium batch: exercises batch padding, lane-dense label rows and the
    # multi-step "parallel" grid that feeds v7x's second TensorCore.
    batch2 = 300
    k_z2, k_lbl2 = jax.random.split(jax.random.PRNGKey(1))
    z2 = jax.random.normal(k_z2, (batch2, latent_dim), jnp.float32)
    labels2 = jax.random.randint(k_lbl2, (batch2,), 0, label_dim, jnp.int32)
    ref2 = torch_ref(z2, labels2)
    out2 = jax.block_until_ready(generator_forward(z2, labels2, prep_f32))
    assert out2.shape == (batch2, output_dim)
    err = float(jnp.max(jnp.abs(out2 - ref2)))
    assert err < 1e-4, err

    print("KERNEL_OK")
</pallas_src>

<mosaic_0001>
module attributes {stable_mosaic.version = 11 : i64} {
  func.func @_mlp_kernel(%arg0: i32, %arg1: memref<1x1x8xi32, #tpu.memory_space<vmem>>, %arg2: memref<8x128xf32, #tpu.memory_space<vmem>>, %arg3: memref<256x128xf32, #tpu.memory_space<vmem>>, %arg4: memref<1x128xf32, #tpu.memory_space<vmem>>, %arg5: memref<128x128xf32, #tpu.memory_space<vmem>>, %arg6: memref<1x128xf32, #tpu.memory_space<vmem>>, %arg7: memref<128x128xf32, #tpu.memory_space<vmem>>, %arg8: memref<1x128xf32, #tpu.memory_space<vmem>>, %arg9: memref<8x128xf32, #tpu.memory_space<vmem>>) attributes {dimension_semantics = [#tpu.dimension_semantics<parallel>], iteration_bounds = array<i64: 1>, scalar_prefetch = 0 : i64, scratch_operands = 0 : i64, tpu.core_type = #tpu.core_type<tc>, window_params = [{transform_indices = @transform_0, window_bounds = array<i64: 1, 1, 8>}, {transform_indices = @transform_1, window_bounds = array<i64: 8, 128>}, {pipeline_mode = #tpu.pipeline_mode<synchronous>, transform_indices = @transform_2, window_bounds = array<i64: 256, 128>}, {pipeline_mode = #tpu.pipeline_mode<synchronous>, transform_indices = @transform_3, window_bounds = array<i64: 1, 128>}, {pipeline_mode = #tpu.pipeline_mode<synchronous>, transform_indices = @transform_4, window_bounds = array<i64: 128, 128>}, {pipeline_mode = #tpu.pipeline_mode<synchronous>, transform_indices = @transform_5, window_bounds = array<i64: 1, 128>}, {pipeline_mode = #tpu.pipeline_mode<synchronous>, transform_indices = @transform_6, window_bounds = array<i64: 128, 128>}, {pipeline_mode = #tpu.pipeline_mode<synchronous>, transform_indices = @transform_7, window_bounds = array<i64: 1, 128>}, {transform_indices = @transform_8, window_bounds = array<i64: 8, 128>}]} {
    %c0 = arith.constant 0 : index
    %c0_0 = arith.constant 0 : index
    %c0_1 = arith.constant 0 : index
    %0 = vector.load %arg1[%c0, %c0_0, %c0_1] : memref<1x1x8xi32, #tpu.memory_space<vmem>>, vector<1x1x8xi32>
    %1 = vector.shape_cast %0 : vector<1x1x8xi32> to vector<1x8xi32>
    %2 = tpu.transpose %1, [1, 0] : vector<1x8xi32> -> vector<8x1xi32>
    %3 = tpu.iota {dimensions = array<i32: 1>} : vector<8x128xi32>
    %4 = vector.broadcast %2 : vector<8x1xi32> to vector<8x128xi32>
    %5 = arith.cmpi eq, %3, %4 : vector<8x128xi32>
    %6 = arith.extui %5 : vector<8x128xi1> to vector<8x128xi32>
    %7 = arith.sitofp %6 : vector<8x128xi32> to vector<8x128xf32>
    %c0_2 = arith.constant 0 : index
    %c0_3 = arith.constant 0 : index
    %8 = vector.load %arg2[%c0_2, %c0_3] : memref<8x128xf32, #tpu.memory_space<vmem>>, vector<8x128xf32>
    %9 = tpu.concatenate %8, %7 in 1 : vector<8x128xf32>, vector<8x128xf32> -> vector<8x256xf32>
    %c0_4 = arith.constant 0 : index
    %c0_5 = arith.constant 0 : index
    %10 = vector.load %arg3[%c0_4, %c0_5] : memref<256x128xf32, #tpu.memory_space<vmem>>, vector<256x128xf32>
    %cst = arith.constant dense<0.000000e+00> : vector<8x128xf32>
    %11 = tpu.matmul %9, %10, %cst {dimension_numbers = #tpu.dot_dimension_numbers<[1], [0], [0], [1], [0, 0, 1, 1], [], []>} : vector<8x256xf32>, vector<256x128xf32>, vector<8x128xf32> -> vector<8x128xf32>
    %c0_6 = arith.constant 0 : index
    %c0_7 = arith.constant 0 : index
    %12 = vector.load %arg4[%c0_6, %c0_7] : memref<1x128xf32, #tpu.memory_space<vmem>>, vector<1x128xf32>
    %13 = vector.broadcast %12 : vector<1x128xf32> to vector<8x128xf32>
    %14 = arith.addf %11, %13 : vector<8x128xf32>
    %cst_8 = arith.constant 0.000000e+00 : f32
    %15 = vector.broadcast %cst_8 : f32 to vector<8x128xf32>
    %16 = arith.maximumf %14, %15 : vector<8x128xf32>
    %c0_9 = arith.constant 0 : index
    %c0_10 = arith.constant 0 : index
    %17 = vector.load %arg5[%c0_9, %c0_10] : memref<128x128xf32, #tpu.memory_space<vmem>>, vector<128x128xf32>
    %cst_11 = arith.constant dense<0.000000e+00> : vector<8x128xf32>
    %18 = tpu.matmul %16, %17, %cst_11 {dimension_numbers = #tpu.dot_dimension_numbers<[1], [0], [0], [1], [0, 0, 1, 1], [], []>} : vector<8x128xf32>, vector<128x128xf32>, vector<8x128xf32> -> vector<8x128xf32>
    %c0_12 = arith.constant 0 : index
    %c0_13 = arith.constant 0 : index
    %19 = vector.load %arg6[%c0_12, %c0_13] : memref<1x128xf32, #tpu.memory_space<vmem>>, vector<1x128xf32>
    %20 = vector.broadcast %19 : vector<1x128xf32> to vector<8x128xf32>
    %21 = arith.addf %18, %20 : vector<8x128xf32>
    %cst_14 = arith.constant 0.000000e+00 : f32
    %22 = vector.broadcast %cst_14 : f32 to vector<8x128xf32>
    %23 = arith.maximumf %21, %22 : vector<8x128xf32>
    %c0_15 = arith.constant 0 : index
    %c0_16 = arith.constant 0 : index
    %24 = vector.load %arg7[%c0_15, %c0_16] : memref<128x128xf32, #tpu.memory_space<vmem>>, vector<128x128xf32>
    %cst_17 = arith.constant dense<0.000000e+00> : vector<8x128xf32>
    %25 = tpu.matmul %23, %24, %cst_17 {dimension_numbers = #tpu.dot_dimension_numbers<[1], [0], [0], [1], [0, 0, 1, 1], [], []>} : vector<8x128xf32>, vector<128x128xf32>, vector<8x128xf32> -> vector<8x128xf32>
    %c0_18 = arith.constant 0 : index
    %c0_19 = arith.constant 0 : index
    %26 = vector.load %arg8[%c0_18, %c0_19] : memref<1x128xf32, #tpu.memory_space<vmem>>, vector<1x128xf32>
    %27 = vector.broadcast %26 : vector<1x128xf32> to vector<8x128xf32>
    %28 = arith.addf %25, %27 : vector<8x128xf32>
    %29 = math.tanh %28 : vector<8x128xf32>
    %c0_20 = arith.constant 0 : index
    %c0_21 = arith.constant 0 : index
    %30 = vector.load %arg9[%c0_20, %c0_21] : memref<8x128xf32, #tpu.memory_space<vmem>>, vector<8x128xf32>
    tpu.vector_store %arg9[%c0_20, %c0_21], %29 {strides = array<i32>} : memref<8x128xf32, #tpu.memory_space<vmem>>, vector<8x128xf32>,
    return
  }
  func.func @transform_0(%arg0: i32) -> (i32, i32, i32) {
    %c0_i32 = arith.constant 0 : i32
    %c0_i32_0 = arith.constant 0 : i32
    %c0_i32_1 = arith.constant 0 : i32
    return %arg0, %c0_i32, %c0_i32_0 : i32, i32, i32
  }
  func.func @transform_1(%arg0: i32) -> (i32, i32) {
    %c0_i32 = arith.constant 0 : i32
    %c0_i32_0 = arith.constant 0 : i32
    return %arg0, %c0_i32 : i32, i32
  }
  func.func @transform_2(%arg0: i32) -> (i32, i32) {
    %c0_i32 = arith.constant 0 : i32
    %c0_i32_0 = arith.constant 0 : i32
    %c0_i32_1 = arith.constant 0 : i32
    return %c0_i32, %c0_i32_0 : i32, i32
  }
  func.func @transform_3(%arg0: i32) -> (i32, i32) {
    %c0_i32 = arith.constant 0 : i32
    %c0_i32_0 = arith.constant 0 : i32
    %c0_i32_1 = arith.constant 0 : i32
    return %c0_i32, %c0_i32_0 : i32, i32
  }
  func.func @transform_4(%arg0: i32) -> (i32, i32) {
    %c0_i32 = arith.constant 0 : i32
    %c0_i32_0 = arith.constant 0 : i32
    %c0_i32_1 = arith.constant 0 : i32
    return %c0_i32, %c0_i32_0 : i32, i32
  }
  func.func @transform_5(%arg0: i32) -> (i32, i32) {
    %c0_i32 = arith.constant 0 : i32
    %c0_i32_0 = arith.constant 0 : i32
    %c0_i32_1 = arith.constant 0 : i32
    return %c0_i32, %c0_i32_0 : i32, i32
  }
  func.func @transform_6(%arg0: i32) -> (i32, i32) {
    %c0_i32 = arith.constant 0 : i32
    %c0_i32_0 = arith.constant 0 : i32
    %c0_i32_1 = arith.constant 0 : i32
    return %c0_i32, %c0_i32_0 : i32, i32
  }
  func.func @transform_7(%arg0: i32) -> (i32, i32) {
    %c0_i32 = arith.constant 0 : i32
    %c0_i32_0 = arith.constant 0 : i32
    %c0_i32_1 = arith.constant 0 : i32
    return %c0_i32, %c0_i32_0 : i32, i32
  }
  func.func @transform_8(%arg0: i32) -> (i32, i32) {
    %c0_i32 = arith.constant 0 : i32
    %c0_i32_0 = arith.constant 0 : i32
    return %arg0, %c0_i32 : i32, i32
  }
}

</mosaic_0001>

<llo_original>
// kernel: tpu_custom_call.1
$region0: #{tpu_custom_call.1}
  #allocation0 [shape = 'u32[]', space=smem, size = 0x4, offset = 0x4, fixed_abs, tag = 'smem constant byte address 0x4 - core index']
  #allocation1 [shape = 'u32[144,128]{1,0:T(1,128)}', space=vmem, size = 0x12000, scoped, tag = 'internal scratch']
  %s0 = inlined_call_operand.hbm [shape: s32[1,1,8], index: 0, kind: input, shape index: {}]
  %s1 = inlined_call_operand.hbm [shape: f32[8,128], index: 1, kind: input, shape index: {}]
  %s2 = inlined_call_operand.hbm [shape: f32[256,128], index: 2, kind: input, shape index: {}]
  %s3 = inlined_call_operand.vmem [shape: f32[1,128], index: 3, kind: input, shape index: {}]
  %s4 = inlined_call_operand.hbm [shape: f32[128,128], index: 4, kind: input, shape index: {}]
  %s5 = inlined_call_operand.vmem [shape: f32[1,128], index: 5, kind: input, shape index: {}]
  %s6 = inlined_call_operand.hbm [shape: f32[128,128], index: 6, kind: input, shape index: {}]
  %s7 = inlined_call_operand.vmem [shape: f32[1,128], index: 7, kind: input, shape index: {}]
  %s8 = inlined_call_operand.hbm [shape: f32[8,128], index: 8, kind: output, shape index: {}]
  %s9 = sld [smem:[#allocation0]]
  $region62: #{tpu_custom_call.1} parent=0
    _
  %s11 = ssub.s32 1, %s9
  %s12 = scalar_select 0, %s11, %s9
  $region1: #{tpu_custom_call.1} parent=0
    #allocation2 [shape = 'u8[512]{0}', space=vmem, size = 0x400, scoped, tag = 'input window, operand 0, single buffered']
    #allocation3 [shape = 's32[1]{0}', space=sflag, size = 0x4, scoped, tag = 'scoped memory for tpu_custom_call.1']
    #allocation4 [shape = 's32[1]{0}', space=sflag, size = 0x4, scoped, tag = 'scoped memory for tpu_custom_call.1']
    #allocation5 [shape = 'u8[4096]{0}', space=vmem, size = 0x1000, scoped, tag = 'input window, operand 1, single buffered']
    #allocation6 [shape = 's32[1]{0}', space=sflag, size = 0x4, scoped, tag = 'scoped memory for tpu_custom_call.1']
    #allocation7 [shape = 'u8[131072]{0}', space=vmem, size = 0x20000, scoped, tag = 'input window, operand 2, single buffered']
    #allocation8 [shape = 'u8[65536]{0}', space=vmem, size = 0x10000, scoped, tag = 'input window, operand 4, single buffered']
    #allocation9 [shape = 's32[1]{0}', space=sflag, size = 0x4, scoped, tag = 'scoped memory for tpu_custom_call.1']
    #allocation10 [shape = 'u8[65536]{0}', space=vmem, size = 0x10000, scoped, tag = 'input window, operand 6, single buffered']
    #allocation11 [shape = 'u8[4096]{0}', space=vmem, size = 0x1000, scoped, tag = 'output window, operand 0, single buffered']
    %13 = vsyncpa [#allocation3], 0
    %14 = vsyncpa [#allocation6], 0
    %15 = vsyncpa [#allocation9], 0
    %16 = vsyncpa [#allocation4], 0
    // Predicated region
    $region2: #{tpu_custom_call.1} parent=1 // pred_check
      _
    $region3: #{tpu_custom_call.1} parent=1 // pred_check_branch
      %18 = sbr.rel (0) target = $region5
    $region4: #{tpu_custom_call.1} parent=1 // pred_region
      %s20 = ssub.s32 16, 16
      %21 = vsyncadd [#allocation3], %s20
      %s23 = sshll.u32 [#allocation2], 4
      %s24 = int_to_ptr.vmem [resolvable:$true] %s23
      %26 = dma.hbm_to_vmem [thread:$0]  %s0, 16, %s24, [#allocation3]
    $region5: #{tpu_custom_call.1} parent=1 // pred_fallthru
      _
    // Predicated region
    $region6: #{tpu_custom_call.1} parent=1 // pred_check
      _
    $region7: #{tpu_custom_call.1} parent=1 // pred_check_branch
      %28 = sbr.rel (0) target = $region9
    $region8: #{tpu_custom_call.1} parent=1 // pred_region
      %s30 = ssub.s32 128, 128
      %31 = vsyncadd [#allocation6], %s30
      %s33 = sshll.u32 [#allocation5], 4
      %s34 = int_to_ptr.vmem [resolvable:$true] %s33
      %36 = dma.hbm_to_vmem [thread:$0]  %s1, 128, %s34, [#allocation6]
    $region9: #{tpu_custom_call.1} parent=1 // pred_fallthru
      _
    // Predicated region
    $region10: #{tpu_custom_call.1} parent=1 // pred_check
      _
    $region11: #{tpu_custom_call.1} parent=1 // pred_check_branch
      %38 = sbr.rel (0) target = $region13
    $region12: #{tpu_custom_call.1} parent=1 // pred_region
      %s40 = ssub.s32 4096, 4096
      %41 = vsyncadd [#allocation6], %s40
      %s42 = sshll.u32 [#allocation7], 4
      %s43 = int_to_ptr.vmem [resolvable:$true] %s42
      %48 = dma.hbm_to_vmem [thread:$0]  %s2, 4096, %s43, [#allocation6], 128, 128, 8
    $region13: #{tpu_custom_call.1} parent=1 // pred_fallthru
      _
    // Predicated region
    $region14: #{tpu_custom_call.1} parent=1 // pred_check
      _
    $region15: #{tpu_custom_call.1} parent=1 // pred_check_branch
      %50 = sbr.rel (0) target = $region17
    $region16: #{tpu_custom_call.1} parent=1 // pred_region
      _
    $region17: #{tpu_custom_call.1} parent=1 // pred_fallthru
      _
    // Predicated region
    $region18: #{tpu_custom_call.1} parent=1 // pred_check
      _
    $region19: #{tpu_custom_call.1} parent=1 // pred_check_branch
      %52 = sbr.rel (0) target = $region21
    $region20: #{tpu_custom_call.1} parent=1 // pred_region
      %s54 = ssub.s32 2048, 2048
      %55 = vsyncadd [#allocation9], %s54
      %s56 = sshll.u32 [#allocation8], 4
      %s57 = int_to_ptr.vmem [resolvable:$true] %s56
      %62 = dma.hbm_to_vmem [thread:$0]  %s4, 2048, %s57, [#allocation9], 128, 128, 8
    $region21: #{tpu_custom_call.1} parent=1 // pred_fallthru
      _
    // Predicated region
    $region22: #{tpu_custom_call.1} parent=1 // pred_check
      _
    $region23: #{tpu_custom_call.1} parent=1 // pred_check_branch
      %64 = sbr.rel (0) target = $region25
    $region24: #{tpu_custom_call.1} parent=1 // pred_region
      _
    $region25: #{tpu_custom_call.1} parent=1 // pred_fallthru
      _
    // Predicated region
    $region26: #{tpu_custom_call.1} parent=1 // pred_check
      _
    $region27: #{tpu_custom_call.1} parent=1 // pred_check_branch
      %66 = sbr.rel (0) target = $region29
    $region28: #{tpu_custom_call.1} parent=1 // pred_region
      %s68 = ssub.s32 2048, 2048
      %69 = vsyncadd [#allocation9], %s68
      %s70 = sshll.u32 [#allocation10], 4
      %s71 = int_to_ptr.vmem [resolvable:$true] %s70
      %76 = dma.hbm_to_vmem [thread:$0]  %s6, 2048, %s71, [#allocation9], 128, 128, 8
    $region29: #{tpu_custom_call.1} parent=1 // pred_fallthru
      _
    // Predicated region
    $region30: #{tpu_custom_call.1} parent=1 // pred_check
      _
    $region31: #{tpu_custom_call.1} parent=1 // pred_check_branch
      %78 = sbr.rel (0) target = $region33
    $region32: #{tpu_custom_call.1} parent=1 // pred_region
      _
    $region33: #{tpu_custom_call.1} parent=1 // pred_fallthru
      _
    // Predicated region
    $region34: #{tpu_custom_call.1} parent=1 // pred_check
      _
    $region35: #{tpu_custom_call.1} parent=1 // pred_check_branch
      %80 = sbr.rel (0) target = $region37
    $region36: #{tpu_custom_call.1} parent=1 // pred_region
      %81 = dma.done [#allocation3], 16
    $region37: #{tpu_custom_call.1} parent=1 // pred_fallthru
      _
    // Predicated region
    $region38: #{tpu_custom_call.1} parent=1 // pred_check
      _
    $region39: #{tpu_custom_call.1} parent=1 // pred_check_branch
      %83 = sbr.rel (0) target = $region41
    $region40: #{tpu_custom_call.1} parent=1 // pred_region
      %84 = dma.done [#allocation6], 128
    $region41: #{tpu_custom_call.1} parent=1 // pred_fallthru
      _
    // Predicated region
    $region42: #{tpu_custom_call.1} parent=1 // pred_check
      _
    $region43: #{tpu_custom_call.1} parent=1 // pred_check_branch
      %86 = sbr.rel (0) target = $region45
    $region44: #{tpu_custom_call.1} parent=1 // pred_region
      %87 = dma.done [#allocation6], 4096
    $region45: #{tpu_custom_call.1} parent=1 // pred_fallthru
      _
    // Predicated region
    $region46: #{tpu_custom_call.1} parent=1 // pred_check
      _
    $region47: #{tpu_custom_call.1} parent=1 // pred_check_branch
      %89 = sbr.rel (0) target = $region49
    $region48: #{tpu_custom_call.1} parent=1 // pred_region
      %90 = dma.done [#allocation9], 2048
    $region49: #{tpu_custom_call.1} parent=1 // pred_fallthru
      _
    // Predicated region
    $region50: #{tpu_custom_call.1} parent=1 // pred_check
      _
    $region51: #{tpu_custom_call.1} parent=1 // pred_check_branch
      %92 = sbr.rel (0) target = $region53
    $region52: #{tpu_custom_call.1} parent=1 // pred_region
      %93 = dma.done [#allocation9], 2048
    $region53: #{tpu_custom_call.1} parent=1 // pred_fallthru
      _
    %v94 = vld [vmem:[#allocation2] sm:$0x1]
    %95 = vxpose.xlu0.b32.start [1/16] %v94, 128
    %96 = vxpose.xlu0.b32.cont [2/16] 0, 128
    %97 = vxpose.xlu0.b32.cont [3/16] 0, 128
    %98 = vxpose.xlu0.b32.cont [4/16] 0, 128
    %99 = vxpose.xlu0.b32.cont [5/16] 0, 128
    %100 = vxpose.xlu0.b32.cont [6/16] 0, 128
    %101 = vxpose.xlu0.b32.cont [7/16] 0, 128
    %102 = vxpose.xlu0.b32.cont [8/16] 0, 128
    %103 = vxpose.xlu0.b32.cont [9/16] 0, 128
    %104 = vxpose.xlu0.b32.cont [10/16] 0, 128
    %105 = vxpose.xlu0.b32.cont [11/16] 0, 128
    %106 = vxpose.xlu0.b32.cont [12/16] 0, 128
    %107 = vxpose.xlu0.b32.cont [13/16] 0, 128
    %108 = vxpose.xlu0.b32.cont [14/16] 0, 128
    %109 = vxpose.xlu0.b32.cont [15/16] 0, 128
    %110 = vxpose.xlu0.b32.end [16/16] 0, 128
    %v111 = vpop.trf.xlu0
    %v112 = vpop.trf.xlu0
    %v113 = vpop.trf.xlu0
    %v114 = vpop.trf.xlu0
    %v115 = vpop.trf.xlu0
    %v116 = vpop.trf.xlu0
    %v117 = vpop.trf.xlu0
    %v118 = vpop.trf.xlu0
    %v119 = vpop.trf.xlu0
    %v120 = vpop.trf.xlu0
    %v121 = vpop.trf.xlu0
    %v122 = vpop.trf.xlu0
    %v123 = vpop.trf.xlu0
    %v124 = vpop.trf.xlu0
    %v125 = vpop.trf.xlu0
    %v126 = vpop.trf.xlu0
    %v127 = vlaneseq
    %v128 = vand.u32 %v127, 127
    %129 = vset.pattern.permute.xlu0 0
    %130 = vperm.xlu0 %129, %v111
    %v131 = vpop.permute.xlu0 %130
    %vm132 = vcmp.eq.s32.totalorder %v128, %v131
    %v133 = vsel %vm132, 1, 0
    %v134 = vcvt.s32.f32 %v133
    %v135 = vld [vmem:[#allocation5] sm:$0xff]
    %v136 = vld [vmem:[#allocation7] sm:$0xff]
    %v137 = vld [vmem:[#allocation7 + $0x8] sm:$0xff]
    %v138 = vld [vmem:[#allocation7 + $0x10] sm:$0xff]
    %v139 = vld [vmem:[#allocation7 + $0x18] sm:$0xff]
    %v140 = vld [vmem:[#allocation7 + $0x20] sm:$0xff]
    %v141 = vld [vmem:[#allocation7 + $0x28] sm:$0xff]
    %v142 = vld [vmem:[#allocation7 + $0x30] sm:$0xff]
    %v143 = vld [vmem:[#allocation7 + $0x38] sm:$0xff]
    %v144 = vld [vmem:[#allocation7 + $0x40] sm:$0xff]
    %v145 = vld [vmem:[#allocation7 + $0x48] sm:$0xff]
    %v146 = vld [vmem:[#allocation7 + $0x50] sm:$0xff]
    %v147 = vld [vmem:[#allocation7 + $0x58] sm:$0xff]
    %v148 = vld [vmem:[#allocation7 + $0x60] sm:$0xff]
    %v149 = vld [vmem:[#allocation7 + $0x68] sm:$0xff]
    %v150 = vld [vmem:[#allocation7 + $0x70] sm:$0xff]
    %v151 = vld [vmem:[#allocation7 + $0x78] sm:$0xff]
    %v152 = vld [vmem:[#allocation7 + $0x80] sm:$0xff]
    %v153 = vld [vmem:[#allocation7 + $0x88] sm:$0xff]
    %v154 = vld [vmem:[#allocation7 + $0x90] sm:$0xff]
    %v155 = vld [vmem:[#allocation7 + $0x98] sm:$0xff]
    %v156 = vld [vmem:[#allocation7 + $0xa0] sm:$0xff]
    %v157 = vld [vmem:[#allocation7 + $0xa8] sm:$0xff]
    %v158 = vld [vmem:[#allocation7 + $0xb0] sm:$0xff]
    %v159 = vld [vmem:[#allocation7 + $0xb8] sm:$0xff]
    %v160 = vld [vmem:[#allocation7 + $0xc0] sm:$0xff]
    %v161 = vld [vmem:[#allocation7 + $0xc8] sm:$0xff]
    %v162 = vld [vmem:[#allocation7 + $0xd0] sm:$0xff]
    %v163 = vld [vmem:[#allocation7 + $0xd8] sm:$0xff]
    %v164 = vld [vmem:[#allocation7 + $0xe0] sm:$0xff]
    %v165 = vld [vmem:[#allocation7 + $0xe8] sm:$0xff]
    %v166 = vld [vmem:[#allocation7 + $0xf0] sm:$0xff]
    %v167 = vld [vmem:[#allocation7 + $0xf8] sm:$0xff]
    %v168 = vld [vmem:[%s3] sm:$0x1]
    %v170 = vlaneseq
    %v171 = vshrl.u32 %v170, 7
    %v172 = vsub.s32 0, %v171
    %v173 = vrot.slane %v168, %v172
    %175 = vmatprep.subr.mxu0 0.0
    %176 = vmatpush1.msra.mxu0 %v136
    %177 = vmatprep.subr.mxu0 0.0
    %178 = vmatpush1.msra.mxu0 %v137
    %179 = vmatprep.subr.mxu0 0.0
    %180 = vmatpush1.msra.mxu0 %v138
    %181 = vmatprep.subr.mxu0 0.0
    %182 = vmatpush1.msra.mxu0 %v139
    %183 = vmatprep.subr.mxu0 0.0
    %184 = vmatpush1.msra.mxu0 %v140
    %185 = vmatprep.subr.mxu0 0.0
    %186 = vmatpush1.msra.mxu0 %v141
    %187 = vmatprep.subr.mxu0 0.0
    %188 = vmatpush1.msra.mxu0 %v142
    %189 = vmatprep.subr.mxu0 0.0
    %190 = vmatpush1.msra.mxu0 %v143
    %191 = vmatprep.subr.mxu0 0.0
    %192 = vmatpush1.msra.mxu0 %v144
    %193 = vmatprep.subr.mxu0 0.0
    %194 = vmatpush1.msra.mxu0 %v145
    %195 = vmatprep.subr.mxu0 0.0
    %196 = vmatpush1.msra.mxu0 %v146
    %197 = vmatprep.subr.mxu0 0.0
    %198 = vmatpush1.msra.mxu0 %v147
    %199 = vmatprep.subr.mxu0 0.0
    %200 = vmatpush1.msra.mxu0 %v148
    %201 = vmatprep.subr.mxu0 0.0
    %202 = vmatpush1.msra.mxu0 %v149
    %203 = vmatprep.subr.mxu0 0.0
    %204 = vmatpush1.msra.mxu0 %v150
    %205 = vmatprep.subr.mxu0 0.0
    %206 = vmatpush1.msra.mxu0 %v151
    %207 = vmatprep.subr.mxu0 0.0
    %208 = vmatpush1.msra.mxu0 %v152
    %209 = vmatprep.subr.mxu0 0.0
    %210 = vmatpush1.msra.mxu0 %v153
    %211 = vmatprep.subr.mxu0 0.0
    %212 = vmatpush1.msra.mxu0 %v154
    %213 = vmatprep.subr.mxu0 0.0
    %214 = vmatpush1.msra.mxu0 %v155
    %215 = vmatprep.subr.mxu0 0.0
    %216 = vmatpush1.msra.mxu0 %v156
    %217 = vmatprep.subr.mxu0 0.0
    %218 = vmatpush1.msra.mxu0 %v157
    %219 = vmatprep.subr.mxu0 0.0
    %220 = vmatpush1.msra.mxu0 %v158
    %221 = vmatprep.subr.mxu0 0.0
    %222 = vmatpush1.msra.mxu0 %v159
    %223 = vmatprep.subr.mxu0 0.0
    %224 = vmatpush1.msra.mxu0 %v160
    %225 = vmatprep.subr.mxu0 0.0
    %226 = vmatpush1.msra.mxu0 %v161
    %227 = vmatprep.subr.mxu0 0.0
    %228 = vmatpush1.msra.mxu0 %v162
    %229 = vmatprep.subr.mxu0 0.0
    %230 = vmatpush1.msra.mxu0 %v163
    %231 = vmatprep.subr.mxu0 0.0
    %232 = vmatpush1.msra.mxu0 %v164
    %233 = vmatprep.subr.mxu0 0.0
    %234 = vmatpush1.msra.mxu0 %v165
    %235 = vmatprep.subr.mxu0 0.0
    %236 = vmatpush1.msra.mxu0 %v166
    %237 = vmatprep.subr.mxu0 0.0
    %238 = vmatpush1.msra.mxu0 %v167
    %239 = vmatprep.mubr.f32.mxu0 %v134
    %240 = vmatmul.mubr.f32.gmra.mrb[0].mxu0 %v135
    %v241 = vpop.f32.mrb[0].mxu0
    %v242 = vadd.f32 %v173, %v241
    %v243 = vpop.f32.mrb[0].mxu0
    %244 = vdwg.mxu0
    %v245 = vmax.f32 %v242, 0.0
    %v246 = vld [vmem:[#allocation8] sm:$0xff]
    %v247 = vld [vmem:[#allocation8 + $0x8] sm:$0xff]
    %v248 = vld [vmem:[#allocation8 + $0x10] sm:$0xff]
    %v249 = vld [vmem:[#allocation8 + $0x18] sm:$0xff]
    %v250 = vld [vmem:[#allocation8 + $0x20] sm:$0xff]
    %v251 = vld [vmem:[#allocation8 + $0x28] sm:$0xff]
    %v252 = vld [vmem:[#allocation8 + $0x30] sm:$0xff]
    %v253 = vld [vmem:[#allocation8 + $0x38] sm:$0xff]
    %v254 = vld [vmem:[#allocation8 + $0x40] sm:$0xff]
    %v255 = vld [vmem:[#allocation8 + $0x48] sm:$0xff]
    %v256 = vld [vmem:[#allocation8 + $0x50] sm:$0xff]
    %v257 = vld [vmem:[#allocation8 + $0x58] sm:$0xff]
    %v258 = vld [vmem:[#allocation8 + $0x60] sm:$0xff]
    %v259 = vld [vmem:[#allocation8 + $0x68] sm:$0xff]
    %v260 = vld [vmem:[#allocation8 + $0x70] sm:$0xff]
    %v261 = vld [vmem:[#allocation8 + $0x78] sm:$0xff]
    %v262 = vld [vmem:[%s5] sm:$0x1]
    %v264 = vlaneseq
    %v265 = vshrl.u32 %v264, 7
    %v266 = vsub.s32 0, %v265
    %v267 = vrot.slane %v262, %v266
    %269 = vmatprep.subr.mxu0 0.0
    %270 = vmatpush1.msra.mxu0 %v246
    %271 = vmatprep.subr.mxu0 0.0
    %272 = vmatpush1.msra.mxu0 %v247
    %273 = vmatprep.subr.mxu0 0.0
    %274 = vmatpush1.msra.mxu0 %v248
    %275 = vmatprep.subr.mxu0 0.0
    %276 = vmatpush1.msra.mxu0 %v249
    %277 = vmatprep.subr.mxu0 0.0
    %278 = vmatpush1.msra.mxu0 %v250
    %279 = vmatprep.subr.mxu0 0.0
    %280 = vmatpush1.msra.mxu0 %v251
    %281 = vmatprep.subr.mxu0 0.0
    %282 = vmatpush1.msra.mxu0 %v252
    %283 = vmatprep.subr.mxu0 0.0
    %284 = vmatpush1.msra.mxu0 %v253
    %285 = vmatprep.subr.mxu0 0.0
    %286 = vmatpush1.msra.mxu0 %v254
    %287 = vmatprep.subr.mxu0 0.0
    %288 = vmatpush1.msra.mxu0 %v255
    %289 = vmatprep.subr.mxu0 0.0
    %290 = vmatpush1.msra.mxu0 %v256
    %291 = vmatprep.subr.mxu0 0.0
    %292 = vmatpush1.msra.mxu0 %v257
    %293 = vmatprep.subr.mxu0 0.0
    %294 = vmatpush1.msra.mxu0 %v258
    %295 = vmatprep.subr.mxu0 0.0
    %296 = vmatpush1.msra.mxu0 %v259
    %297 = vmatprep.subr.mxu0 0.0
    %298 = vmatpush1.msra.mxu0 %v260
    %299 = vmatprep.subr.mxu0 0.0
    %300 = vmatpush1.msra.mxu0 %v261
    %301 = vmatprep.subr.mxu0 0.0
    %302 = vmatpush1.msra.mxu0 0.0
    %303 = vmatprep.subr.mxu0 0.0
    %304 = vmatpush1.msra.mxu0 0.0
    %305 = vmatprep.subr.mxu0 0.0
    %306 = vmatpush1.msra.mxu0 0.0
    %307 = vmatprep.subr.mxu0 0.0
    %308 = vmatpush1.msra.mxu0 0.0
    %309 = vmatprep.subr.mxu0 0.0
    %310 = vmatpush1.msra.mxu0 0.0
    %311 = vmatprep.subr.mxu0 0.0
    %312 = vmatpush1.msra.mxu0 0.0
    %313 = vmatprep.subr.mxu0 0.0
    %314 = vmatpush1.msra.mxu0 0.0
    %315 = vmatprep.subr.mxu0 0.0
    %316 = vmatpush1.msra.mxu0 0.0
    %317 = vmatprep.subr.mxu0 0.0
    %318 = vmatpush1.msra.mxu0 0.0
    %319 = vmatprep.subr.mxu0 0.0
    %320 = vmatpush1.msra.mxu0 0.0
    %321 = vmatprep.subr.mxu0 0.0
    %322 = vmatpush1.msra.mxu0 0.0
    %323 = vmatprep.subr.mxu0 0.0
    %324 = vmatpush1.msra.mxu0 0.0
    %325 = vmatprep.subr.mxu0 0.0
    %326 = vmatpush1.msra.mxu0 0.0
    %327 = vmatprep.subr.mxu0 0.0
    %328 = vmatpush1.msra.mxu0 0.0
    %329 = vmatprep.subr.mxu0 0.0
    %330 = vmatpush1.msra.mxu0 0.0
    %331 = vmatprep.subr.mxu0 0.0
    %332 = vmatpush1.msra.mxu0 0.0
    %333 = vmatprep.mubr.f32.mxu0 0.0
    %334 = vmatmul.mubr.f32.gmra.mrb[0].mxu0 %v245
    %v335 = vpop.f32.mrb[0].mxu0
    %v336 = vadd.f32 %v267, %v335
    %v337 = vpop.f32.mrb[0].mxu0
    %338 = vdwg.mxu0
    %v339 = vmax.f32 %v336, 0.0
    %v340 = vld [vmem:[#allocation10] sm:$0xff]
    %v341 = vld [vmem:[#allocation10 + $0x8] sm:$0xff]
    %v342 = vld [vmem:[#allocation10 + $0x10] sm:$0xff]
    %v343 = vld [vmem:[#allocation10 + $0x18] sm:$0xff]
    %v344 = vld [vmem:[#allocation10 + $0x20] sm:$0xff]
    %v345 = vld [vmem:[#allocation10 + $0x28] sm:$0xff]
    %v346 = vld [vmem:[#allocation10 + $0x30] sm:$0xff]
    %v347 = vld [vmem:[#allocation10 + $0x38] sm:$0xff]
    %v348 = vld [vmem:[#allocation10 + $0x40] sm:$0xff]
    %v349 = vld [vmem:[#allocation10 + $0x48] sm:$0xff]
    %v350 = vld [vmem:[#allocation10 + $0x50] sm:$0xff]
    %v351 = vld [vmem:[#allocation10 + $0x58] sm:$0xff]
    %v352 = vld [vmem:[#allocation10 + $0x60] sm:$0xff]
    %v353 = vld [vmem:[#allocation10 + $0x68] sm:$0xff]
    %v354 = vld [vmem:[#allocation10 + $0x70] sm:$0xff]
    %v355 = vld [vmem:[#allocation10 + $0x78] sm:$0xff]
    %v356 = vld [vmem:[%s7] sm:$0x1]
    %v358 = vlaneseq
    %v359 = vshrl.u32 %v358, 7
    %v360 = vsub.s32 0, %v359
    %v361 = vrot.slane %v356, %v360
    %363 = vmatprep.subr.mxu0 0.0
    %364 = vmatpush1.msra.mxu0 %v340
    %365 = vmatprep.subr.mxu0 0.0
    %366 = vmatpush1.msra.mxu0 %v341
    %367 = vmatprep.subr.mxu0 0.0
    %368 = vmatpush1.msra.mxu0 %v342
    %369 = vmatprep.subr.mxu0 0.0
    %370 = vmatpush1.msra.mxu0 %v343
    %371 = vmatprep.subr.mxu0 0.0
    %372 = vmatpush1.msra.mxu0 %v344
    %373 = vmatprep.subr.mxu0 0.0
    %374 = vmatpush1.msra.mxu0 %v345
    %375 = vmatprep.subr.mxu0 0.0
    %376 = vmatpush1.msra.mxu0 %v346
    %377 = vmatprep.subr.mxu0 0.0
    %378 = vmatpush1.msra.mxu0 %v347
    %379 = vmatprep.subr.mxu0 0.0
    %380 = vmatpush1.msra.mxu0 %v348
    %381 = vmatprep.subr.mxu0 0.0
    %382 = vmatpush1.msra.mxu0 %v349
    %383 = vmatprep.subr.mxu0 0.0
    %384 = vmatpush1.msra.mxu0 %v350
    %385 = vmatprep.subr.mxu0 0.0
    %386 = vmatpush1.msra.mxu0 %v351
    %387 = vmatprep.subr.mxu0 0.0
    %388 = vmatpush1.msra.mxu0 %v352
    %389 = vmatprep.subr.mxu0 0.0
    %390 = vmatpush1.msra.mxu0 %v353
    %391 = vmatprep.subr.mxu0 0.0
    %392 = vmatpush1.msra.mxu0 %v354
    %393 = vmatprep.subr.mxu0 0.0
    %394 = vmatpush1.msra.mxu0 %v355
    %395 = vmatprep.subr.mxu0 0.0
    %396 = vmatpush1.msra.mxu0 0.0
    %397 = vmatprep.subr.mxu0 0.0
    %398 = vmatpush1.msra.mxu0 0.0
    %399 = vmatprep.subr.mxu0 0.0
    %400 = vmatpush1.msra.mxu0 0.0
    %401 = vmatprep.subr.mxu0 0.0
    %402 = vmatpush1.msra.mxu0 0.0
    %403 = vmatprep.subr.mxu0 0.0
    %404 = vmatpush1.msra.mxu0 0.0
    %405 = vmatprep.subr.mxu0 0.0
    %406 = vmatpush1.msra.mxu0 0.0
    %407 = vmatprep.subr.mxu0 0.0
    %408 = vmatpush1.msra.mxu0 0.0
    %409 = vmatprep.subr.mxu0 0.0
    %410 = vmatpush1.msra.mxu0 0.0
    %411 = vmatprep.subr.mxu0 0.0
    %412 = vmatpush1.msra.mxu0 0.0
    %413 = vmatprep.subr.mxu0 0.0
    %414 = vmatpush1.msra.mxu0 0.0
    %415 = vmatprep.subr.mxu0 0.0
    %416 = vmatpush1.msra.mxu0 0.0
    %417 = vmatprep.subr.mxu0 0.0
    %418 = vmatpush1.msra.mxu0 0.0
    %419 = vmatprep.subr.mxu0 0.0
    %420 = vmatpush1.msra.mxu0 0.0
    %421 = vmatprep.subr.mxu0 0.0
    %422 = vmatpush1.msra.mxu0 0.0
    %423 = vmatprep.subr.mxu0 0.0
    %424 = vmatpush1.msra.mxu0 0.0
    %425 = vmatprep.subr.mxu0 0.0
    %426 = vmatpush1.msra.mxu0 0.0
    %427 = vmatprep.mubr.f32.mxu0 0.0
    %428 = vmatmul.mubr.f32.gmra.mrb[0].mxu0 %v339
    %v429 = vpop.f32.mrb[0].mxu0
    %v430 = vadd.f32 %v361, %v429
    %v431 = vpop.f32.mrb[0].mxu0
    %432 = vdwg.mxu0
    %v433 = vtanh.pop %v430
    %434 = vst [vmem:[#allocation11] sm:$0xff] %v433
    // Predicated region
    $region54: #{tpu_custom_call.1} parent=1 // pred_check
      _
    $region55: #{tpu_custom_call.1} parent=1 // pred_check_branch
      %436 = sbr.rel (0) target = $region57
    $region56: #{tpu_custom_call.1} parent=1 // pred_region
      %s438 = ssub.s32 128, 128
      %439 = vsyncadd [#allocation4], %s438
      %s441 = sshll.u32 [#allocation11], 4
      %s442 = int_to_ptr.vmem [resolvable:$true] %s441
      %444 = dma.vmem_to_hbm [thread:$0]  %s442, 128, %s8, [#allocation4]
    $region57: #{tpu_custom_call.1} parent=1 // pred_fallthru
      _
    // Predicated region
    $region58: #{tpu_custom_call.1} parent=1 // pred_check
      _
    $region59: #{tpu_custom_call.1} parent=1 // pred_check_branch
      %446 = sbr.rel (0) target = $region61
    $region60: #{tpu_custom_call.1} parent=1 // pred_region
      %447 = dma.done [#allocation4], 128
    $region61: #{tpu_custom_call.1} parent=1 // pred_fallthru
      _
    %448 = vsyncpa [#allocation3], 1
    %449 = vsyncpa [#allocation6], 1
    %450 = vsyncpa [#allocation9], 1
    %451 = vsyncpa [#allocation4], 1

</llo_original>
